<compile_context>
chip_gen: v5e
topology: v5e:2x2
jax: 0.10.0
libtpu: 0.0.40
codegen_flags: <defaults>
</compile_context>

<pallas_src>
import jax
import jax.numpy as jnp
from jax.experimental import pallas as pl
from jax.experimental.pallas import tpu as pltpu

_COLS = 512                   # lane-dense last dim (multiple of 128) -> unmasked vst
_TILE_BYTES_2D = 4 << 20      # ~4 MiB payload per tile (review: v6e/v7x sweet spot)
_TILE_BYTES_1D = 512 << 10    # conservative tile for the ragged 1-D path
_VMEM_LIMIT = 32 << 20        # raises v5e's 16 MiB default; default on v6e/v7x
_MIN_KERNEL_BYTES = 2 << 20   # below this a fused XLA multiply wins (launch overhead)


def _rescale_kernel(w_ref, x_ref, o_ref):
    # w_ref: (1, 1) f32 scalar in SMEM; x_ref / o_ref: VMEM tiles (2-D or 1-D).
    # Multiply in f32 and cast only the product (PyTorch promotion semantics).
    w = w_ref[0, 0]
    o_ref[...] = (w * x_ref[...].astype(jnp.float32)).astype(o_ref.dtype)


def _launch(w, x_view, out_dtype, block_shape, index_map, grid, donate):
    extra = {}
    if donate and x_view.dtype == out_dtype:
        # Alias x -> out: halves peak HBM footprint; requires caller donation.
        extra["input_output_aliases"] = {1: 0}
    return pl.pallas_call(
        _rescale_kernel,
        out_shape=jax.ShapeDtypeStruct(x_view.shape, out_dtype),
        grid_spec=pltpu.PrefetchScalarGridSpec(
            num_scalar_prefetch=0,
            grid=grid,
            in_specs=[
                pl.BlockSpec(memory_space=pltpu.SMEM),     # weight (1, 1) f32
                pl.BlockSpec(block_shape, index_map),      # x tile
            ],
            out_specs=pl.BlockSpec(block_shape, index_map),
        ),
        compiler_params=pltpu.CompilerParams(
            dimension_semantics=("parallel",),
            vmem_limit_bytes=_VMEM_LIMIT,
        ),
        **extra,
    )(w, x_view)


def rescale(x: jax.Array, weight: jax.Array, *,
            min_kernel_bytes: int = _MIN_KERNEL_BYTES,
            donate: bool = False) -> jax.Array:
    """Pallas equivalent of Rescale.forward: weight (1,1) * x (any shape)."""
    assert weight.size == 1
    orig_shape = x.shape
    total = int(x.size)
    out_dtype = jnp.result_type(weight.dtype, x.dtype)   # torch promotion (f32 * x)

    # Tiny-input short-circuit: pallas_call launch overhead dwarfs the work.
    if total == 0 or total * x.dtype.itemsize < min_kernel_bytes:
        return (weight.reshape(()) * x).astype(out_dtype)

    w = jnp.asarray(weight, jnp.float32).reshape(1, 1)
    itemsize = x.dtype.itemsize

    if total % _COLS == 0:
        # Lane-dense 2-D slab; reshape is a free bitcast (no pad, no slice).
        rows = total // _COLS
        x_view = x.reshape(rows, _COLS)
        # Constant tile BYTES across dtypes: 2048 f32 / 4096 bf16 / 8192 int8 rows.
        tile_rows = min(rows, max(8, _TILE_BYTES_2D // (_COLS * itemsize)))
        grid = (pl.cdiv(rows, tile_rows),)
        out = _launch(w, x_view, out_dtype, (tile_rows, _COLS),
                      lambda i: (i, 0), grid, donate)
    else:
        # Ragged total: flat 1-D blocked kernel; Pallas pads the read and masks
        # the write of the last partial block, so no host-side pad/slice passes.
        block = min(total, max(1024, _TILE_BYTES_1D // itemsize))
        x_view = x.reshape(total)
        grid = (pl.cdiv(total, block),)
        out = _launch(w, x_view, out_dtype, (block,),
                      lambda i: (i,), grid, donate)

    return out.reshape(orig_shape)


if __name__ == "__main__":
    key = jax.random.PRNGKey(0)
    k1, k2, k3, k4, k5 = jax.random.split(key, 5)

    # Deterministic parameter init matching nn.Parameter(torch.ones(1, 1)).
    weight = jnp.ones((1, 1), dtype=jnp.float32)
    # Non-trivial scale used to actually validate the multiply.
    weight2 = jnp.full((1, 1), 1.5, dtype=jnp.float32)

    # 1) Small NCHW input (divisible by 512): 2-D lane-dense path, single tile.
    x1 = jax.random.normal(k1, (2, 4, 16, 16), dtype=jnp.float32)
    out1 = jax.block_until_ready(rescale(x1, weight, min_kernel_bytes=0))
    assert out1.shape == x1.shape and out1.dtype == x1.dtype
    assert jnp.allclose(out1, weight.reshape(()) * x1, atol=1e-6)

    # 2) Odd size: ragged 1-D path, single full-array block (no pad/slice).
    x2 = jax.random.normal(k2, (3, 5, 37, 41), dtype=jnp.float32)
    out2 = jax.block_until_ready(rescale(x2, weight2, min_kernel_bytes=0))
    assert out2.shape == x2.shape
    assert jnp.allclose(out2, weight2.reshape(()) * x2, atol=1e-6)

    # 3) Odd size, multi-block 1-D path: exercises the masked partial last block.
    x3 = jax.random.normal(k3, (3, 5, 151, 97), dtype=jnp.float32)
    out3 = jax.block_until_ready(rescale(x3, weight2, min_kernel_bytes=0))
    assert out3.shape == x3.shape
    assert jnp.allclose(out3, weight2.reshape(()) * x3, atol=1e-6)

    # 4) Larger divisible input through the default (>= threshold) path:
    #    2304 rows of 512 with 2048-row tiles -> 2 grid steps + ragged row tail.
    x4 = jax.random.normal(k4, (2, 4, 384, 384), dtype=jnp.float32)
    out4 = jax.block_until_ready(rescale(x4, weight2))
    assert out4.shape == x4.shape
    assert jnp.allclose(out4, weight2.reshape(()) * x4, atol=1e-6)

    # 5) bf16 input: dtype-scaled tiles + f32 output (PyTorch type promotion).
    x5 = jax.random.normal(k5, (2, 4, 64, 64), dtype=jnp.bfloat16)
    out5 = jax.block_until_ready(rescale(x5, weight2, min_kernel_bytes=0))
    assert out5.shape == x5.shape and out5.dtype == jnp.float32
    assert jnp.allclose(out5, weight2.reshape(()) * x5, atol=1e-6, rtol=1e-3)

    print("KERNEL_OK")
</pallas_src>

<mosaic_0001>
module attributes {stable_mosaic.version = 11 : i64} {
  func.func @_rescale_kernel(%arg0: i32, %arg1: memref<1x1xf32, #tpu.memory_space<smem>>, %arg2: memref<4x512xf32, #tpu.memory_space<vmem>>, %arg3: memref<4x512xf32, #tpu.memory_space<vmem>>) attributes {dimension_semantics = [#tpu.dimension_semantics<parallel>], iteration_bounds = array<i64: 1>, scalar_prefetch = 0 : i64, scratch_operands = 0 : i64, tpu.core_type = #tpu.core_type<tc>, window_params = [{transform_indices = @transform_0, window_bounds = array<i64: 1, 1>}, {transform_indices = @transform_1, window_bounds = array<i64: 4, 512>}, {transform_indices = @transform_2, window_bounds = array<i64: 4, 512>}]} {
    %c0 = arith.constant 0 : index
    %c0_0 = arith.constant 0 : index
    %0 = memref.load %arg1[%c0, %c0_0] : memref<1x1xf32, #tpu.memory_space<smem>>
    %c0_1 = arith.constant 0 : index
    %c0_2 = arith.constant 0 : index
    %1 = vector.load %arg2[%c0_1, %c0_2] : memref<4x512xf32, #tpu.memory_space<vmem>>, vector<4x512xf32>
    %2 = vector.broadcast %0 : f32 to vector<4x512xf32>
    %3 = arith.mulf %2, %1 : vector<4x512xf32>
    %c0_3 = arith.constant 0 : index
    %c0_4 = arith.constant 0 : index
    %4 = vector.load %arg3[%c0_3, %c0_4] : memref<4x512xf32, #tpu.memory_space<vmem>>, vector<4x512xf32>
    tpu.vector_store %arg3[%c0_3, %c0_4], %3 {strides = array<i32>} : memref<4x512xf32, #tpu.memory_space<vmem>>, vector<4x512xf32>,
    return
  }
  func.func @transform_0(%arg0: i32) -> (i32, i32) {
    %c0_i32 = arith.constant 0 : i32
    %c0_i32_0 = arith.constant 0 : i32
    %c0_i32_1 = arith.constant 0 : i32
    return %c0_i32, %c0_i32_0 : i32, i32
  }
  func.func @transform_1(%arg0: i32) -> (i32, i32) {
    %c0_i32 = arith.constant 0 : i32
    %c0_i32_0 = arith.constant 0 : i32
    return %arg0, %c0_i32 : i32, i32
  }
  func.func @transform_2(%arg0: i32) -> (i32, i32) {
    %c0_i32 = arith.constant 0 : i32
    %c0_i32_0 = arith.constant 0 : i32
    return %arg0, %c0_i32 : i32, i32
  }
}

</mosaic_0001>

<llo_original>
// kernel: tpu_custom_call.1
$region0: #{tpu_custom_call.1}
  #allocation0 [shape = 'u32[]', space=smem, size = 0x4, offset = 0x4, fixed_abs, tag = 'smem constant byte address 0x4 - core index']
  #allocation1 [shape = 'u32[72,128]{1,0:T(1,128)}', space=vmem, size = 0x9000, scoped, tag = 'internal scratch']
  #allocation2 [shape = 'f32[1,1]{1,0:T(1,128)S(6)}', space=smem, size = 0x200, scoped, tag = 'scoped memory for tpu_custom_call.1']
  %s0 = inlined_call_operand.<no memory space> [shape: f32[1,1], index: 0, kind: input, shape index: {}]
  %s1 = inlined_call_operand.hbm [shape: f32[4,512], index: 1, kind: input, shape index: {}]
  %s2 = inlined_call_operand.hbm [shape: f32[4,512], index: 2, kind: output, shape index: {}]
  %s3 = sld [smem:[#allocation0]]
  $region22: #{tpu_custom_call.1} parent=0
    _
  %s5 = ssub.s32 1, %s3
  %s6 = scalar_select 0, %s5, %s3
  %7 = sst [smem:[#allocation2]] %s0
  $region1: #{tpu_custom_call.1} parent=0
    #allocation3 [shape = 'u8[8192]{0}', space=vmem, size = 0x2000, scoped, tag = 'input window, operand 1, single buffered']
    #allocation4 [shape = 's32[1]{0}', space=sflag, size = 0x4, scoped, tag = 'scoped memory for tpu_custom_call.1']
    #allocation5 [shape = 's32[1]{0}', space=sflag, size = 0x4, scoped, tag = 'scoped memory for tpu_custom_call.1']
    #allocation6 [shape = 'u8[8192]{0}', space=vmem, size = 0x2000, scoped, tag = 'output window, operand 0, single buffered']
    %8 = vsyncpa [#allocation4], 0
    %9 = vsyncpa [#allocation5], 0
    // Predicated region
    $region2: #{tpu_custom_call.1} parent=1 // pred_check
      _
    $region3: #{tpu_custom_call.1} parent=1 // pred_check_branch
      %11 = sbr.rel (0) target = $region5
    $region4: #{tpu_custom_call.1} parent=1 // pred_region
      _
    $region5: #{tpu_custom_call.1} parent=1 // pred_fallthru
      _
    // Predicated region
    $region6: #{tpu_custom_call.1} parent=1 // pred_check
      _
    $region7: #{tpu_custom_call.1} parent=1 // pred_check_branch
      %13 = sbr.rel (0) target = $region9
    $region8: #{tpu_custom_call.1} parent=1 // pred_region
      %15 = vsyncadd [#allocation4], 0
      %s17 = sshll.u32 %s1, 4
      %s18 = int_to_ptr.hbm [resolvable:$true] %s17
      %s19 = sshll.u32 [#allocation3], 4
      %s20 = int_to_ptr.vmem [resolvable:$true] %s19
      %22 = dma.hbm_to_vmem [thread:$0]  %s18, 256, %s20, [#allocation4]
    $region9: #{tpu_custom_call.1} parent=1 // pred_fallthru
      _
    // Predicated region
    $region10: #{tpu_custom_call.1} parent=1 // pred_check
      _
    $region11: #{tpu_custom_call.1} parent=1 // pred_check_branch
      %24 = sbr.rel (0) target = $region13
    $region12: #{tpu_custom_call.1} parent=1 // pred_region
      %26 = dma.done [#allocation4], 256
    $region13: #{tpu_custom_call.1} parent=1 // pred_fallthru
      _
    %s27 = sld [smem:[#allocation2]]
    %v28 = vld [vmem:[#allocation3] sm:$0xff]
    %v29 = vld [vmem:[#allocation3 + $0x8] sm:$0xff]
    %v30 = vstv %s27
    %v31 = vmul.f32 %v30, %v28
    %v32 = vmul.f32 %v30, %v29
    %33 = vst [vmem:[#allocation6] sm:$0xff] %v31
    %34 = vst [vmem:[#allocation6 + $0x8] sm:$0xff] %v32
    // Predicated region
    $region14: #{tpu_custom_call.1} parent=1 // pred_check
      _
    $region15: #{tpu_custom_call.1} parent=1 // pred_check_branch
      %36 = sbr.rel (0) target = $region17
    $region16: #{tpu_custom_call.1} parent=1 // pred_region
      %38 = vsyncadd [#allocation5], 0
      %s40 = sshll.u32 [#allocation6], 4
      %s41 = int_to_ptr.vmem [resolvable:$true] %s40
      %s42 = sshll.u32 %s2, 4
      %s43 = int_to_ptr.hbm [resolvable:$true] %s42
      %45 = dma.vmem_to_hbm [thread:$0]  %s41, 256, %s43, [#allocation5]
    $region17: #{tpu_custom_call.1} parent=1 // pred_fallthru
      _
    // Predicated region
    $region18: #{tpu_custom_call.1} parent=1 // pred_check
      _
    $region19: #{tpu_custom_call.1} parent=1 // pred_check_branch
      %47 = sbr.rel (0) target = $region21
    $region20: #{tpu_custom_call.1} parent=1 // pred_region
      %49 = dma.done [#allocation5], 256
    $region21: #{tpu_custom_call.1} parent=1 // pred_fallthru
      _
    %50 = vsyncpa [#allocation4], 1
    %51 = vsyncpa [#allocation5], 1

</llo_original>
